<compile_context>
chip_gen: v5e
topology: v5e:2x2
jax: 0.10.0
libtpu: 0.0.40
codegen_flags: <defaults>
</compile_context>

<pallas_src>
import functools
import math

import jax
import jax.numpy as jnp
from jax.experimental import pallas as pl
from jax.experimental.pallas import tpu as pltpu


def _round_up(v, m):
    return (v + m - 1) // m * m


def _projection_kernel(x_ref, w_ref, b_ref, o_ref, h_ref, *,
                       apply_act, negative_slope, compute_dtype):
    """One grid step == (one row tile, one Linear layer) of the fused stack.

    l == 0       : load this row tile of x into the VMEM-resident activation h
    every step   : y = h @ W_l + b_l  (MXU, f32 accumulate, f32 bias epilogue)
    l == last    : write y (pre-activation) to the output tile
    l <  last    : h <- LeakyReLU(y) when layer_type > 1, else h <- y
    """
    l = pl.program_id(1)
    n_layers = pl.num_programs(1)

    @pl.when(l == 0)
    def _():
        h_ref[...] = x_ref[...].astype(jnp.float32)

    lhs = h_ref[...].astype(compute_dtype)   # (tm, D)
    rhs = w_ref[0]                           # (D, D), already compute_dtype
    y = jnp.dot(lhs, rhs, preferred_element_type=jnp.float32)
    y = y + b_ref[0]                         # (1, D) f32 bias, row-broadcast

    # Last layer stores the un-activated result (matches nn.Sequential order).
    @pl.when(l == n_layers - 1)
    def _():
        o_ref[...] = y.astype(o_ref.dtype)

    # Activation only *between* layers; no dead store on the last step.
    @pl.when(l < n_layers - 1)
    def _():
        h = y
        if apply_act:
            h = jnp.where(y >= 0.0, y, negative_slope * y)
        h_ref[...] = h                       # carried (in VMEM) to next layer


def projection_forward(x, params, *, layer_type=0, negative_slope=0.2,
                       compute_dtype=jnp.float32, max_row_tile=512):
    """Fused forward pass of Projection as a single Pallas kernel.

    x      : (M, in_planes) float32
    params : list of (w, b) with w (in_i, out_i) pre-transposed, b (out_i,)
    """
    n_layers = len(params)
    M, in_planes = x.shape
    out_planes = params[-1][0].shape[1]

    # One common padded feature dim so every layer's weight is (D, D) and the
    # output slab is lane-dense (multiple of 128).
    dims = [in_planes] + [w.shape[1] for (w, _) in params]
    D = _round_up(max(dims), 128)

    # Row tile: multiple of 8, capped so the activation scratch stays small.
    m8 = _round_up(M, 8)
    tm = min(m8, _round_up(max_row_tile, 8))
    Mp = _round_up(M, tm)
    n_m = Mp // tm

    w_list, b_list = [], []
    for (w, b) in params:
        ki, ni = w.shape
        w_list.append(jnp.pad(w, ((0, D - ki), (0, D - ni))).astype(compute_dtype))
        b_list.append(jnp.pad(b, (0, D - ni)).astype(jnp.float32))
    w_stack = jnp.stack(w_list)                      # (L, D, D)
    b_stack = jnp.stack(b_list)[:, None, :]          # (L, 1, D)
    x_pad = jnp.pad(x.astype(jnp.float32), ((0, Mp - M), (0, D - in_planes)))

    kernel = functools.partial(
        _projection_kernel,
        apply_act=(layer_type > 1),
        negative_slope=negative_slope,
        compute_dtype=compute_dtype,
    )

    cost = pl.CostEstimate(
        flops=2 * Mp * D * D * n_layers,
        transcendentals=0,
        bytes_accessed=(x_pad.size * 4
                        + n_m * (w_stack.size * w_stack.dtype.itemsize
                                 + b_stack.size * 4)
                        + Mp * D * 4),
    )

    w_itemsize = jnp.dtype(compute_dtype).itemsize
    vmem_bytes = (2 * tm * D * 4            # x (double-buffered)
                  + 2 * D * D * w_itemsize  # weight (double-buffered)
                  + 2 * D * 4               # bias
                  + 2 * tm * D * 4          # output
                  + tm * D * 4              # activation scratch
                  + (2 << 20))              # headroom
    vmem_limit = int(min(max(vmem_bytes, 32 << 20), 128 << 20))

    out = pl.pallas_call(
        kernel,
        out_shape=jax.ShapeDtypeStruct((Mp, D), jnp.float32),
        grid=(n_m, n_layers),
        in_specs=[
            pl.BlockSpec((tm, D), lambda i, l: (i, 0)),        # x row tile
            pl.BlockSpec((1, D, D), lambda i, l: (l, 0, 0)),   # per-layer W
            pl.BlockSpec((1, 1, D), lambda i, l: (l, 0, 0)),   # per-layer b
        ],
        out_specs=pl.BlockSpec((tm, D), lambda i, l: (i, 0)),  # resident tile
        scratch_shapes=[pltpu.VMEM((tm, D), jnp.float32)],     # activation h
        compiler_params=pltpu.CompilerParams(
            dimension_semantics=("parallel", "arbitrary"),
            vmem_limit_bytes=vmem_limit),
        cost_estimate=cost,
    )(x_pad, w_stack, b_stack)

    return out[:M, :out_planes].astype(x.dtype)


def init_projection_params(key, in_planes, out_planes=None, n_layers=1):
    """Parameter init matching Projection.__init__ shapes.

    Weights: xavier_normal_ (std = sqrt(2 / (fan_in + fan_out))).
    Biases:  PyTorch Linear default uniform(-1/sqrt(fan_in), 1/sqrt(fan_in)).
    Weights are stored as (in, out) == PyTorch's (out, in) transposed.
    """
    if out_planes is None:
        out_planes = in_planes
    params = []
    _out = None
    for i in range(n_layers):
        _in = in_planes if i == 0 else _out
        _out = out_planes
        key, wk, bk = jax.random.split(key, 3)
        std = math.sqrt(2.0 / (_in + _out))
        w = std * jax.random.normal(wk, (_in, _out), dtype=jnp.float32)
        bound = 1.0 / math.sqrt(_in)
        bias = jax.random.uniform(bk, (_out,), jnp.float32, -bound, bound)
        params.append((w, bias))
    return params


def _reference(x, params, layer_type, negative_slope=0.2):
    ref = x
    n_layers = len(params)
    for i, (w, b) in enumerate(params):
        ref = ref @ w + b
        if (i < n_layers - 1) and (layer_type > 1):
            ref = jnp.where(ref >= 0.0, ref, negative_slope * ref)
    return ref


if __name__ == "__main__":
    key = jax.random.PRNGKey(0)

    # ---- test 1: batch=8, in=32, out=32, two layers, layer_type=2 ----------
    # (exercises the LeakyReLU-between-layers path at a tiny shape)
    batch, in_planes, out_planes, n_layers, layer_type = 8, 32, 32, 2, 2
    key, xkey, pkey = jax.random.split(key, 3)
    x = jax.random.normal(xkey, (batch, in_planes), dtype=jnp.float32)
    params = init_projection_params(pkey, in_planes, out_planes, n_layers)

    y = projection_forward(x, params, layer_type=layer_type)
    y = jax.block_until_ready(y)
    ref = _reference(x, params, layer_type)
    assert y.shape == (batch, out_planes)
    assert jnp.allclose(y, ref, atol=1e-5, rtol=1e-5)

    # bf16 MXU path (f32 accumulate) on the same inputs.
    y16 = projection_forward(x, params, layer_type=layer_type,
                             compute_dtype=jnp.bfloat16)
    y16 = jax.block_until_ready(y16)
    ref16 = x
    for i, (w, b) in enumerate(params):
        ref16 = jnp.dot(ref16.astype(jnp.bfloat16), w.astype(jnp.bfloat16),
                        preferred_element_type=jnp.float32) + b
        if (i < n_layers - 1) and (layer_type > 1):
            ref16 = jnp.where(ref16 >= 0.0, ref16, 0.2 * ref16)
    assert y16.shape == (batch, out_planes)
    assert jnp.allclose(y16, ref16.astype(y16.dtype), atol=2e-2, rtol=2e-2)

    # ---- test 2: ragged batch / mixed dims / 3 layers, no activation -------
    # (exercises feature-dim padding, row-tile padding and layer_type=0 path)
    batch2, in2, out2, n_layers2, layer_type2 = 300, 96, 64, 3, 0
    key, xkey2, pkey2 = jax.random.split(key, 3)
    x2 = jax.random.normal(xkey2, (batch2, in2), dtype=jnp.float32)
    params2 = init_projection_params(pkey2, in2, out2, n_layers2)

    y2 = projection_forward(x2, params2, layer_type=layer_type2,
                            max_row_tile=128)
    y2 = jax.block_until_ready(y2)
    ref2 = _reference(x2, params2, layer_type2)
    assert y2.shape == (batch2, out2)
    assert jnp.allclose(y2, ref2, atol=1e-4, rtol=1e-4)

    print("KERNEL_OK")
</pallas_src>

<mosaic_0001>
module attributes {stable_mosaic.version = 11 : i64} {
  func.func @_projection_kernel(%arg0: i32, %arg1: i32, %arg2: memref<8x128xf32, #tpu.memory_space<vmem>>, %arg3: memref<1x128x128xf32, #tpu.memory_space<vmem>>, %arg4: memref<1x1x128xf32, #tpu.memory_space<vmem>>, %arg5: memref<8x128xf32, #tpu.memory_space<vmem>>, %arg6: memref<8x128xf32, #tpu.memory_space<vmem>>) attributes {dimension_semantics = [#tpu.dimension_semantics<parallel>, #tpu.dimension_semantics<arbitrary>], iteration_bounds = array<i64: 1, 2>, scalar_prefetch = 0 : i64, scratch_operands = 1 : i64, tpu.core_type = #tpu.core_type<tc>, window_params = [{transform_indices = @transform_0, window_bounds = array<i64: 8, 128>}, {transform_indices = @transform_1, window_bounds = array<i64: 1, 128, 128>}, {transform_indices = @transform_2, window_bounds = array<i64: 1, 1, 128>}, {transform_indices = @transform_3, window_bounds = array<i64: 8, 128>}]} {
    %c0_i32 = arith.constant 0 : i32
    %0 = arith.cmpi eq, %arg1, %c0_i32 : i32
    %1 = arith.extui %0 : i1 to i32
    %c0_i32_0 = arith.constant 0 : i32
    %2 = arith.cmpi ne, %1, %c0_i32_0 : i32
    scf.if %2 {
      %c0_11 = arith.constant 0 : index
      %c0_12 = arith.constant 0 : index
      %17 = vector.load %arg2[%c0_11, %c0_12] : memref<8x128xf32, #tpu.memory_space<vmem>>, vector<8x128xf32>
      %c0_13 = arith.constant 0 : index
      %c0_14 = arith.constant 0 : index
      %18 = vector.load %arg6[%c0_13, %c0_14] : memref<8x128xf32, #tpu.memory_space<vmem>>, vector<8x128xf32>
      tpu.vector_store %arg6[%c0_13, %c0_14], %17 {strides = array<i32>} : memref<8x128xf32, #tpu.memory_space<vmem>>, vector<8x128xf32>,
    } else {
    }
    %c0 = arith.constant 0 : index
    %c0_1 = arith.constant 0 : index
    %3 = vector.load %arg6[%c0, %c0_1] : memref<8x128xf32, #tpu.memory_space<vmem>>, vector<8x128xf32>
    %c0_2 = arith.constant 0 : index
    %c0_3 = arith.constant 0 : index
    %c0_4 = arith.constant 0 : index
    %4 = vector.load %arg3[%c0_2, %c0_3, %c0_4] : memref<1x128x128xf32, #tpu.memory_space<vmem>>, vector<1x128x128xf32>
    %5 = vector.shape_cast %4 : vector<1x128x128xf32> to vector<128x128xf32>
    %cst = arith.constant dense<0.000000e+00> : vector<8x128xf32>
    %6 = tpu.matmul %3, %5, %cst {dimension_numbers = #tpu.dot_dimension_numbers<[1], [0], [0], [1], [0, 0, 1, 1], [], []>} : vector<8x128xf32>, vector<128x128xf32>, vector<8x128xf32> -> vector<8x128xf32>
    %c0_5 = arith.constant 0 : index
    %c0_6 = arith.constant 0 : index
    %c0_7 = arith.constant 0 : index
    %7 = vector.load %arg4[%c0_5, %c0_6, %c0_7] : memref<1x1x128xf32, #tpu.memory_space<vmem>>, vector<1x1x128xf32>
    %8 = vector.shape_cast %7 : vector<1x1x128xf32> to vector<1x128xf32>
    %9 = vector.broadcast %8 : vector<1x128xf32> to vector<8x128xf32>
    %10 = arith.addf %6, %9 : vector<8x128xf32>
    %c1_i32 = arith.constant 1 : i32
    %11 = arith.cmpi eq, %arg1, %c1_i32 : i32
    %12 = arith.extui %11 : i1 to i32
    %c0_i32_8 = arith.constant 0 : i32
    %13 = arith.cmpi ne, %12, %c0_i32_8 : i32
    scf.if %13 {
      %c0_11 = arith.constant 0 : index
      %c0_12 = arith.constant 0 : index
      %17 = vector.load %arg5[%c0_11, %c0_12] : memref<8x128xf32, #tpu.memory_space<vmem>>, vector<8x128xf32>
      tpu.vector_store %arg5[%c0_11, %c0_12], %10 {strides = array<i32>} : memref<8x128xf32, #tpu.memory_space<vmem>>, vector<8x128xf32>,
    } else {
    }
    %c1_i32_9 = arith.constant 1 : i32
    %14 = arith.cmpi slt, %arg1, %c1_i32_9 : i32
    %15 = arith.extui %14 : i1 to i32
    %c0_i32_10 = arith.constant 0 : i32
    %16 = arith.cmpi ne, %15, %c0_i32_10 : i32
    scf.if %16 {
      %cst_11 = arith.constant 0.000000e+00 : f32
      %17 = vector.broadcast %cst_11 : f32 to vector<8x128xf32>
      %18 = arith.cmpf oge, %10, %17 : vector<8x128xf32>
      %cst_12 = arith.constant 2.000000e-01 : f32
      %19 = vector.broadcast %cst_12 : f32 to vector<8x128xf32>
      %20 = arith.mulf %19, %10 : vector<8x128xf32>
      %21 = arith.select %18, %10, %20 : vector<8x128xi1>, vector<8x128xf32>
      %c0_13 = arith.constant 0 : index
      %c0_14 = arith.constant 0 : index
      %22 = vector.load %arg6[%c0_13, %c0_14] : memref<8x128xf32, #tpu.memory_space<vmem>>, vector<8x128xf32>
      tpu.vector_store %arg6[%c0_13, %c0_14], %21 {strides = array<i32>} : memref<8x128xf32, #tpu.memory_space<vmem>>, vector<8x128xf32>,
    } else {
    }
    return
  }
  func.func @transform_0(%arg0: i32, %arg1: i32) -> (i32, i32) {
    %c0_i32 = arith.constant 0 : i32
    %c0_i32_0 = arith.constant 0 : i32
    return %arg0, %c0_i32 : i32, i32
  }
  func.func @transform_1(%arg0: i32, %arg1: i32) -> (i32, i32, i32) {
    %c0_i32 = arith.constant 0 : i32
    %c0_i32_0 = arith.constant 0 : i32
    %c0_i32_1 = arith.constant 0 : i32
    return %arg1, %c0_i32, %c0_i32_0 : i32, i32, i32
  }
  func.func @transform_2(%arg0: i32, %arg1: i32) -> (i32, i32, i32) {
    %c0_i32 = arith.constant 0 : i32
    %c0_i32_0 = arith.constant 0 : i32
    %c0_i32_1 = arith.constant 0 : i32
    return %arg1, %c0_i32, %c0_i32_0 : i32, i32, i32
  }
  func.func @transform_3(%arg0: i32, %arg1: i32) -> (i32, i32) {
    %c0_i32 = arith.constant 0 : i32
    %c0_i32_0 = arith.constant 0 : i32
    return %arg0, %c0_i32 : i32, i32
  }
}

</mosaic_0001>

<llo_original>
// kernel: tpu_custom_call.1
$region0: #{tpu_custom_call.1}
  #allocation0 [shape = 'u32[]', space=smem, size = 0x4, offset = 0x4, fixed_abs, tag = 'smem constant byte address 0x4 - core index']
  #allocation1 [shape = 'u32[72,128]{1,0:T(1,128)}', space=vmem, size = 0x9000, scoped, tag = 'internal scratch']
  #allocation2 [shape = 'f32[8,128]{1,0:T(8,128)}', space=vmem, size = 0x1000, scoped, tag = 'scratch operand']
  %s0 = inlined_call_operand.hbm [shape: f32[8,128], index: 0, kind: input, shape index: {}]
  %s1 = inlined_call_operand.hbm [shape: f32[2,128,128], index: 1, kind: input, shape index: {}]
  %s2 = inlined_call_operand.hbm [shape: f32[2,1,128], index: 2, kind: input, shape index: {}]
  %s3 = inlined_call_operand.hbm [shape: f32[8,128], index: 3, kind: output, shape index: {}]
  %s4 = sld [smem:[#allocation0]]
  $region69: #{tpu_custom_call.1} parent=0
    _
  %s6 = ssub.s32 1, %s4
  %s7 = scalar_select 0, %s6, %s4
  $region1: #{tpu_custom_call.1} parent=0
    #allocation3 [shape = 'u8[4096]{0}', space=vmem, size = 0x1000, scoped, tag = 'input window, operand 0, single buffered']
    #allocation4 [shape = 's32[2]{0}', space=sflag, size = 0x8, scoped, tag = 'scoped memory for tpu_custom_call.1']
    #allocation5 [shape = 's32[2]{0}', space=sflag, size = 0x8, scoped, tag = 'scoped memory for tpu_custom_call.1']
    #allocation6 [shape = 'u8[131072]{0}', space=vmem, size = 0x20000, scoped, tag = 'input window, operand 1']
    #allocation7 [shape = 's32[2]{0}', space=sflag, size = 0x8, scoped, tag = 'scoped memory for tpu_custom_call.1']
    #allocation8 [shape = 'u8[1024]{0}', space=vmem, size = 0x400, scoped, tag = 'input window, operand 2']
    #allocation9 [shape = 'u8[4096]{0}', space=vmem, size = 0x1000, scoped, tag = 'output window, operand 0, single buffered']
    %8 = vsyncpa [#allocation4], 0
    %9 = vsyncpa [#allocation7], 0
    %s10 = scalar_lea.sflag [#allocation7], 1
    %11 = vsyncpa %s10, 0
    %12 = vsyncpa [#allocation5], 0
    loop: start=0, step=1, limit=4
    $region2: #{tpu_custom_call.1} parent=1 // loop_pre_header
      _
    $region3: #{tpu_custom_call.1} parent=1 // loop_header
      %s14 = sphi 0, %s18
      %p15 = scmp.ge.s32.totalorder %s14, 4
      %s21 = sphi 0, %s33
      %s22 = sphi 0, %s29
      %s23 = sphi 0, %s21
      %s24 = sphi 0, %s22
      %s25 = sphi 0, %s23
      %s26 = sphi 0, %s24
      %s36 = sphi 0, %s38
      %s39 = sphi 0, %s36
      %s40 = sphi 0, %s39
      %s56 = sphi 0, %s40
      %s62 = sphi 0, %s64
      %s65 = sphi 0, %s62
      %s66 = sphi 0, %s65
      %s82 = sphi 0, %s66
      %s88 = sphi 0, %s90
      %s91 = sphi 0, %s88
      %s92 = sphi 0, %s91
      %s108 = sphi 0, %s92
      %s114 = sphi 0, %s116
      %s117 = sphi 0, %s114
      %s118 = sphi 0, %s117
      %s134 = sphi 0, %s118
    $region4: #{tpu_custom_call.1} parent=1 // loop_header_branch
      %17 = sbr.rel (%p15) target = $region8
    $region5: #{tpu_custom_call.1} parent=1 // loop_body
      %s19 = ssub.s32 %s14, 1
      %s20 = ssub.s32 %s14, 2
      %s27 = sadd.s32 1, %s22
      %p28 = scmp.ge.s32.totalorder %s27, 2
      %s29 = scalar_select %p28, 0, %s27
      %s30 = sadd.s32 1, %s21
      %s31 = scalar_select %p28, %s30, %s21
      %p32 = scmp.ge.s32.totalorder %s31, 1
      %s33 = scalar_select %p32, 0, %s31
      %s34 = ssub.s32 %s21, %s33
      %p35 = scmp.eq.s32.totalorder %s34, 0
      %s37 = sadd.s32 %s36, 1
      %s38 = scalar_select %p35, %s36, %s37
      %p41 = pneg %p35
      %p42 = scmp.eq.s32.totalorder %s14, 1
      %p43 = por %p41, %p42
      %p44 = scmp.ne.s32.totalorder %s36, %s39
      %p45 = scmp.eq.s32.totalorder %s14, 0
      %p46 = por %p44, %p45
      %p47 = scmp.ne.s32.totalorder %s36, %s39
      %p48 = scmp.eq.s32.totalorder %s19, 1
      %p49 = por %p47, %p48
      %p50 = scmp.ne.s32.totalorder %s39, %s40
      %p51 = scmp.eq.s32.totalorder %s19, 0
      %p52 = por %p50, %p51
      %p53 = scmp.ne.s32.totalorder %s39, %s40
      %p54 = scmp.eq.s32.totalorder %s20, 1
      %p55 = por %p53, %p54
      %p57 = scmp.ne.s32.totalorder %s40, %s56
      %p58 = scmp.eq.s32.totalorder %s20, 0
      %p59 = por %p57, %p58
      %s60 = ssub.s32 %s22, %s29
      %p61 = scmp.eq.s32.totalorder %s60, 0
      %s63 = sadd.s32 %s62, 1
      %s64 = scalar_select %p61, %s62, %s63
      %p67 = pneg %p61
      %p68 = scmp.eq.s32.totalorder %s14, 1
      %p69 = por %p67, %p68
      %p70 = scmp.ne.s32.totalorder %s62, %s65
      %p71 = scmp.eq.s32.totalorder %s14, 0
      %p72 = por %p70, %p71
      %p73 = scmp.ne.s32.totalorder %s62, %s65
      %p74 = scmp.eq.s32.totalorder %s19, 1
      %p75 = por %p73, %p74
      %p76 = scmp.ne.s32.totalorder %s65, %s66
      %p77 = scmp.eq.s32.totalorder %s19, 0
      %p78 = por %p76, %p77
      %p79 = scmp.ne.s32.totalorder %s65, %s66
      %p80 = scmp.eq.s32.totalorder %s20, 1
      %p81 = por %p79, %p80
      %p83 = scmp.ne.s32.totalorder %s66, %s82
      %p84 = scmp.eq.s32.totalorder %s20, 0
      %p85 = por %p83, %p84
      %s86 = ssub.s32 %s22, %s29
      %p87 = scmp.eq.s32.totalorder %s86, 0
      %s89 = sadd.s32 %s88, 1
      %s90 = scalar_select %p87, %s88, %s89
      %p93 = pneg %p87
      %p94 = scmp.eq.s32.totalorder %s14, 1
      %p95 = por %p93, %p94
      %p96 = scmp.ne.s32.totalorder %s88, %s91
      %p97 = scmp.eq.s32.totalorder %s14, 0
      %p98 = por %p96, %p97
      %p99 = scmp.ne.s32.totalorder %s88, %s91
      %p100 = scmp.eq.s32.totalorder %s19, 1
      %p101 = por %p99, %p100
      %p102 = scmp.ne.s32.totalorder %s91, %s92
      %p103 = scmp.eq.s32.totalorder %s19, 0
      %p104 = por %p102, %p103
      %p105 = scmp.ne.s32.totalorder %s91, %s92
      %p106 = scmp.eq.s32.totalorder %s20, 1
      %p107 = por %p105, %p106
      %p109 = scmp.ne.s32.totalorder %s92, %s108
      %p110 = scmp.eq.s32.totalorder %s20, 0
      %p111 = por %p109, %p110
      %s112 = ssub.s32 %s21, %s33
      %p113 = scmp.eq.s32.totalorder %s112, 0
      %s115 = sadd.s32 %s114, 1
      %s116 = scalar_select %p113, %s114, %s115
      %p119 = pneg %p113
      %p120 = scmp.eq.s32.totalorder %s14, 1
      %p121 = por %p119, %p120
      %p122 = scmp.ne.s32.totalorder %s114, %s117
      %p123 = scmp.eq.s32.totalorder %s14, 0
      %p124 = por %p122, %p123
      %p125 = scmp.ne.s32.totalorder %s114, %s117
      %p126 = scmp.eq.s32.totalorder %s19, 1
      %p127 = por %p125, %p126
      %p128 = scmp.ne.s32.totalorder %s117, %s118
      %p129 = scmp.eq.s32.totalorder %s19, 0
      %p130 = por %p128, %p129
      %p131 = scmp.ne.s32.totalorder %s117, %s118
      %p132 = scmp.eq.s32.totalorder %s20, 1
      %p133 = por %p131, %p132
      %p135 = scmp.ne.s32.totalorder %s118, %s134
      %p136 = scmp.eq.s32.totalorder %s20, 0
      %p137 = por %p135, %p136
      %p138 = scmp.le.s32.totalorder 1, %s14
      %p139 = scmp.lt.s32.totalorder %s14, 3
      %p140 = pnand %p138, %p139
      %p141 = pneg %p140
      // Predicated region
      $region9: #{tpu_custom_call.1} parent=5 // pred_check
        _
      $region10: #{tpu_custom_call.1} parent=5 // pred_check_branch
        %143 = sbr.rel (%p140) target = $region12
      $region11: #{tpu_custom_call.1} parent=5 // pred_region
        %s144 = ssub.s32 %s14, 1
        // Predicated region
        $region13: #{tpu_custom_call.1} parent=11 // pred_check
          %p145 = pneg %p52
        $region14: #{tpu_custom_call.1} parent=11 // pred_check_branch
          %147 = sbr.rel (%p145) target = $region16
        $region15: #{tpu_custom_call.1} parent=11 // pred_region
          %149 = vsyncadd [#allocation4], 0
          %s150 = smul.addr %s23, 8
          %s151 = scalar_lea.hbm %s0, %s150
          %s153 = sshll.u32 %s151, 4
          %s154 = int_to_ptr.hbm [resolvable:$true] %s153
          %s155 = sshll.u32 [#allocation3], 4
          %s156 = int_to_ptr.vmem [resolvable:$true] %s155
          %158 = dma.hbm_to_vmem [thread:$0]  %s154, 128, %s156, [#allocation4]
        $region16: #{tpu_custom_call.1} parent=11 // pred_fallthru
          _
      $region12: #{tpu_custom_call.1} parent=5 // pred_fallthru
        _
      %p159 = scmp.lt.s32.totalorder %s14, 2
      // Predicated region
      $region17: #{tpu_custom_call.1} parent=5 // pred_check
        %p160 = pneg %p159
      $region18: #{tpu_custom_call.1} parent=5 // pred_check_branch
        %162 = sbr.rel (%p160) target = $region20
      $region19: #{tpu_custom_call.1} parent=5 // pred_region
        // Predicated region
        $region21: #{tpu_custom_call.1} parent=19 // pred_check
          %p163 = pneg %p72
        $region22: #{tpu_custom_call.1} parent=19 // pred_check_branch
          %165 = sbr.rel (%p163) target = $region24
        $region23: #{tpu_custom_call.1} parent=19 // pred_region
          %s166 = sand.u32 %s14, 1
          %s167 = scalar_lea.sflag [#allocation7], %s166
          %s168 = sand.u32 %s62, 1
          %s169 = smul.addr %s168, 128
          %s170 = scalar_lea.vmem [#allocation6], %s169
          %172 = vsyncadd %s167, 0
          %s173 = smul.addr %s22, 16
          %s174 = smul.addr %s173, 8
          %s175 = scalar_lea.hbm %s1, %s174
          %s176 = sshll.u32 %s175, 4
          %s177 = int_to_ptr.hbm [resolvable:$true] %s176
          %s178 = sshll.u32 %s170, 4
          %s179 = int_to_ptr.vmem [resolvable:$true] %s178
          %184 = dma.hbm_to_vmem [thread:$0]  %s177, 2048, %s179, %s167, 128, 128, 8
        $region24: #{tpu_custom_call.1} parent=19 // pred_fallthru
          _
        // Predicated region
        $region25: #{tpu_custom_call.1} parent=19 // pred_check
          %p185 = pneg %p98
        $region26: #{tpu_custom_call.1} parent=19 // pred_check_branch
          %187 = sbr.rel (%p185) target = $region28
        $region27: #{tpu_custom_call.1} parent=19 // pred_region
          %s188 = sand.u32 %s14, 1
          %s189 = scalar_lea.sflag [#allocation7], %s188
          %s190 = sand.u32 %s88, 1
          %s191 = scalar_lea.vmem [#allocation8], %s190
          %193 = vsyncadd %s189, 0
          %s194 = scalar_lea.hbm %s2, %s22
          %s196 = sshll.u32 %s194, 4
          %s197 = int_to_ptr.hbm [resolvable:$true] %s196
          %s198 = sshll.u32 %s191, 4
          %s199 = int_to_ptr.vmem [resolvable:$true] %s198
          %201 = dma.hbm_to_vmem [thread:$0]  %s197, 16, %s199, %s189
        $region28: #{tpu_custom_call.1} parent=19 // pred_fallthru
          _
      $region20: #{tpu_custom_call.1} parent=5 // pred_fallthru
        _
      %p202 = scmp.le.s32.totalorder 1, %s14
      %p203 = scmp.lt.s32.totalorder %s14, 3
      %p204 = pnand %p202, %p203
      %p205 = pneg %p204
      // Predicated region
      $region29: #{tpu_custom_call.1} parent=5 // pred_check
        _
      $region30: #{tpu_custom_call.1} parent=5 // pred_check_branch
        %207 = sbr.rel (%p204) target = $region32
      $region31: #{tpu_custom_call.1} parent=5 // pred_region
        %s208 = ssub.s32 %s14, 1
        // Predicated region
        $region33: #{tpu_custom_call.1} parent=31 // pred_check
          %p209 = pneg %p52
        $region34: #{tpu_custom_call.1} parent=31 // pred_check_branch
          %211 = sbr.rel (%p209) target = $region36
        $region35: #{tpu_custom_call.1} parent=31 // pred_region
          %213 = dma.done [#allocation4], 128
        $region36: #{tpu_custom_call.1} parent=31 // pred_fallthru
          _
        %s214 = sand.u32 %s19, 1
        %s215 = scalar_lea.sflag [#allocation7], %s214
        %s216 = sand.u32 %s65, 1
        %s217 = smul.addr %s216, 128
        %s218 = scalar_lea.vmem [#allocation6], %s217
        // Predicated region
        $region37: #{tpu_custom_call.1} parent=31 // pred_check
          %p219 = pneg %p78
        $region38: #{tpu_custom_call.1} parent=31 // pred_check_branch
          %221 = sbr.rel (%p219) target = $region40
        $region39: #{tpu_custom_call.1} parent=31 // pred_region
          %223 = dma.done %s215, 2048
        $region40: #{tpu_custom_call.1} parent=31 // pred_fallthru
          _
        %s224 = sand.u32 %s19, 1
        %s225 = scalar_lea.sflag [#allocation7], %s224
        %s226 = sand.u32 %s91, 1
        %s227 = scalar_lea.vmem [#allocation8], %s226
        // Predicated region
        $region41: #{tpu_custom_call.1} parent=31 // pred_check
          %p228 = pneg %p104
        $region42: #{tpu_custom_call.1} parent=31 // pred_check_branch
          %230 = sbr.rel (%p228) target = $region44
        $region43: #{tpu_custom_call.1} parent=31 // pred_region
          %232 = dma.done %s225, 16
        $region44: #{tpu_custom_call.1} parent=31 // pred_fallthru
          _
        %p233 = pneg %p52
        %p234 = pneg %p49
        %s235 = sand.u32 %s19, 1
        %s236 = scalar_lea.sflag [#allocation7], %s235
        %s237 = sand.u32 %s65, 1
        %s238 = smul.addr %s237, 128
        %s239 = scalar_lea.vmem [#allocation6], %s238
        %p240 = pneg %p78
        %p241 = pneg %p75
        %s242 = sand.u32 %s19, 1
        %s243 = scalar_lea.sflag [#allocation7], %s242
        %s244 = sand.u32 %s91, 1
        %s245 = scalar_lea.vmem [#allocation8], %s244
        %p246 = pneg %p104
        %p247 = pneg %p101
        %p248 = pneg %p130
        %p249 = pneg %p127
        %p250 = scmp.eq.s32.totalorder %s24, 0
        // Predicated region
        $region45: #{tpu_custom_call.1} parent=31 // pred_check
          %p251 = pneg %p250
        $region46: #{tpu_custom_call.1} parent=31 // pred_check_branch
          %253 = sbr.rel (%p251) target = $region48
        $region47: #{tpu_custom_call.1} parent=31 // pred_region
          %v254 = vld [vmem:[#allocation3] sm:$0xff]
          %255 = vst [vmem:[#allocation2] sm:$0xff] %v254
        $region48: #{tpu_custom_call.1} parent=31 // pred_fallthru
          _
        %v256 = vld [vmem:[#allocation2] sm:$0xff]
        %v257 = vld [vmem:[%s218] sm:$0xff]
        %v258 = vld [vmem:[%s218 + $0x8] sm:$0xff]
        %v259 = vld [vmem:[%s218 + $0x10] sm:$0xff]
        %v260 = vld [vmem:[%s218 + $0x18] sm:$0xff]
        %v261 = vld [vmem:[%s218 + $0x20] sm:$0xff]
        %v262 = vld [vmem:[%s218 + $0x28] sm:$0xff]
        %v263 = vld [vmem:[%s218 + $0x30] sm:$0xff]
        %v264 = vld [vmem:[%s218 + $0x38] sm:$0xff]
        %v265 = vld [vmem:[%s218 + $0x40] sm:$0xff]
        %v266 = vld [vmem:[%s218 + $0x48] sm:$0xff]
        %v267 = vld [vmem:[%s218 + $0x50] sm:$0xff]
        %v268 = vld [vmem:[%s218 + $0x58] sm:$0xff]
        %v269 = vld [vmem:[%s218 + $0x60] sm:$0xff]
        %v270 = vld [vmem:[%s218 + $0x68] sm:$0xff]
        %v271 = vld [vmem:[%s218 + $0x70] sm:$0xff]
        %v272 = vld [vmem:[%s218 + $0x78] sm:$0xff]
        %v273 = vld [vmem:[%s227] sm:$0x1]
        %v275 = vperm.slane %v273, 0
        %277 = vmatpush.msra.mxu0 %v272
        %278 = vmatpush.msra.mxu0 %v271
        %279 = vmatpush.msra.mxu0 %v270
        %280 = vmatpush.msra.mxu0 %v269
        %281 = vmatpush.msra.mxu0 %v268
        %282 = vmatpush.msra.mxu0 %v267
        %283 = vmatpush.msra.mxu0 %v266
        %284 = vmatpush.msra.mxu0 %v265
        %285 = vmatpush.msra.mxu0 %v264
        %286 = vmatpush.msra.mxu0 %v263
        %287 = vmatpush.msra.mxu0 %v262
        %288 = vmatpush.msra.mxu0 %v261
        %289 = vmatpush.msra.mxu0 %v260
        %290 = vmatpush.msra.mxu0 %v259
        %291 = vmatpush.msra.mxu0 %v258
        %292 = vmatpush.msra.mxu0 %v257
        %293 = vmatmul.f32.gmra.mxu0 %v256
        %v294 = vpop.f32.mrf.mxu0
        %v295 = vadd.f32 %v275, %v294
        %296 = vdwg.mxu0
        %p297 = scmp.eq.s32.totalorder %s24, 1
        // Predicated region
        $region49: #{tpu_custom_call.1} parent=31 // pred_check
          %p298 = pneg %p297
        $region50: #{tpu_custom_call.1} parent=31 // pred_check_branch
          %300 = sbr.rel (%p298) target = $region52
        $region51: #{tpu_custom_call.1} parent=31 // pred_region
          %301 = vst [vmem:[#allocation9] sm:$0xff] %v295
        $region52: #{tpu_custom_call.1} parent=31 // pred_fallthru
          _
        %p302 = scmp.lt.s32.totalorder %s24, 1
        // Predicated region
        $region53: #{tpu_custom_call.1} parent=31 // pred_check
          %p303 = pneg %p302
        $region54: #{tpu_custom_call.1} parent=31 // pred_check_branch
          %305 = sbr.rel (%p303) target = $region56
        $region55: #{tpu_custom_call.1} parent=31 // pred_region
          %vm306 = vcmp.ge.f32.partialorder %v295, 0.0
          %v307 = vmul.f32 %v295, 0.2
          %v308 = vsel %vm306, %v295, %v307
          %309 = vst [vmem:[#allocation2] sm:$0xff] %v308
        $region56: #{tpu_custom_call.1} parent=31 // pred_fallthru
          _
        // Predicated region
        $region57: #{tpu_custom_call.1} parent=31 // pred_check
          %p310 = pneg %p127
        $region58: #{tpu_custom_call.1} parent=31 // pred_check_branch
          %312 = sbr.rel (%p310) target = $region60
        $region59: #{tpu_custom_call.1} parent=31 // pred_region
          %314 = vsyncadd [#allocation5], 0
          %s315 = smul.addr %s23, 8
          %s316 = scalar_lea.hbm %s3, %s315
          %s318 = sshll.u32 [#allocation9], 4
          %s319 = int_to_ptr.vmem [resolvable:$true] %s318
          %s320 = sshll.u32 %s316, 4
          %s321 = int_to_ptr.hbm [resolvable:$true] %s320
          %323 = dma.vmem_to_hbm [thread:$0]  %s319, 128, %s321, [#allocation5]
        $region60: #{tpu_custom_call.1} parent=31 // pred_fallthru
          _
        // Predicated region
        $region61: #{tpu_custom_call.1} parent=31 // pred_check
          %p324 = pneg %p127
        $region62: #{tpu_custom_call.1} parent=31 // pred_check_branch
          %326 = sbr.rel (%p324) target = $region64
        $region63: #{tpu_custom_call.1} parent=31 // pred_region
          %328 = dma.done [#allocation5], 128
        $region64: #{tpu_custom_call.1} parent=31 // pred_fallthru
          _
      $region32: #{tpu_custom_call.1} parent=5 // pred_fallthru
        _
      %p329 = scmp.le.s32.totalorder 2, %s14
      // Predicated region
      $region65: #{tpu_custom_call.1} parent=5 // pred_check
        %p330 = pneg %p329
      $region66: #{tpu_custom_call.1} parent=5 // pred_check_branch
        %332 = sbr.rel (%p330) target = $region68
      $region67: #{tpu_custom_call.1} parent=5 // pred_region
        %s333 = ssub.s32 %s14, 2
      $region68: #{tpu_custom_call.1} parent=5 // pred_fallthru
        _
    $region6: #{tpu_custom_call.1} parent=1 // loop_footer
      %s18 = sadd.s32 1, %s14
    $region7: #{tpu_custom_call.1} parent=1 // loop_footer_branch
      %13 = sbr.rel target = $region3
    $region8: #{tpu_custom_call.1} parent=1 // loop_exit
      _
    %334 = vsyncpa [#allocation4], 1
    %s335 = scalar_lea.sflag [#allocation4], 1
    %336 = vsyncpa %s335, 1
    %337 = vsyncpa [#allocation7], 1
    %s338 = scalar_lea.sflag [#allocation7], 1
    %339 = vsyncpa %s338, 1
    %340 = vsyncpa [#allocation5], 1
    %s341 = scalar_lea.sflag [#allocation5], 1
    %342 = vsyncpa %s341, 1

</llo_original>
